<compile_context>
chip_gen: v7x
topology: tpu7x:2x2x1
jax: 0.10.0
libtpu: 0.0.40
codegen_flags: <defaults>
</compile_context>

<pallas_src>
import functools

import jax
import jax.numpy as jnp
from jax.experimental import pallas as pl
from jax.experimental.pallas import tpu as pltpu


def _round_up(n, m):
    return ((n + m - 1) // m) * m


def _sublane(dtype):
    # Native sublane packing: 8 for 4-byte, 16 for 2-byte, 32 for 1-byte dtypes.
    return max(8, 32 // jnp.dtype(dtype).itemsize)


def _vmem_capacity_bytes():
    try:
        cap = getattr(pltpu.get_tpu_info(), "vmem_capacity_bytes", None)
        if cap:
            return int(cap)
    except Exception:
        pass
    return 64 * 1024 * 1024  # conservative fallback: v7x per-TensorCore VMEM


def _vmem_estimate(tm, ti, H, xsize, wsize):
    return (2 * 3 * ti * H * wsize      # double-buffered (gate|up) + down weight slices
            + 2 * 2 * tm * H * xsize    # double-buffered x + out tiles
            + tm * H * 4)               # f32 accumulator scratch


def choose_tiles(T, H, I, x_dtype, w_dtype):
    """Pick (tm, ti) jointly against the device's physical VMEM capacity."""
    sub = _sublane(x_dtype)
    xsize = jnp.dtype(x_dtype).itemsize
    wsize = jnp.dtype(w_dtype).itemsize

    budget = _vmem_capacity_bytes() - 6 * 1024 * 1024   # compiler-scratch headroom

    ti_cands = [c for c in (1024, 768, 512, 384, 256, 128) if c <= I and I % c == 0]
    if not ti_cands:
        ti_cands = [I]

    T_sub = _round_up(T, sub)
    if T_sub <= 256:
        # Decode / tiny batch: inherently weight-bandwidth bound; one token tile.
        tm_cands = [T_sub]
    else:
        # Prefill: large tiles for weight re-use, but keep >= 2 token tiles so
        # the parallel axis can split across the two v7x TensorCores.
        cap = max(256, _round_up(-(-T // 2), sub))
        tm_cands = [c for c in (1024, 768, 640, 512, 384, 256) if c <= cap] or [256]

    ti_pref = [c for c in ti_cands if c >= min(256, I)] or ti_cands
    for tm in tm_cands:                 # largest tm first
        for ti in ti_pref:              # largest ti first, never below 256 here
            if int(_vmem_estimate(tm, ti, H, xsize, wsize) * 1.1) <= budget:
                return tm, ti
    # Last resort (huge H / f32 weights on a small-VMEM part): smallest tiles.
    return tm_cands[-1], ti_cands[-1]


def vmem_limit_for(tm, ti, H, x_dtype, w_dtype):
    cap = _vmem_capacity_bytes()
    est = _vmem_estimate(tm, ti, H,
                         jnp.dtype(x_dtype).itemsize,
                         jnp.dtype(w_dtype).itemsize)
    return int(min(cap - 2 * 1024 * 1024,
                   max(int(est * 1.3), 32 * 1024 * 1024)))


def prepare_deepseek_v2_mlp_weights(w_gate_up, w_down, *, ti):
    """One-time weight repack (do at weight-load time, not per forward call).

    w_gate_up: [2*I, H] PyTorch [out, in]; rows [0:I]=gate, rows [I:2I]=up
               (vLLM MergedColumnParallelLinear layout).
    w_down:    [H, I]   PyTorch [out, in].

    Returns:
      w_gu_packed [2*I, H]: gate block k and up block k adjacent per ti rows,
                            so one contiguous (2*ti, H) DMA feeds one MXU pass.
      w_down_t    [I, H]:   transposed so each reduction step streams a
                            contiguous (ti, H) row block (full-BW DMA).
    """
    two_I, H = w_gate_up.shape
    I = two_I // 2
    assert I % ti == 0, "ti must divide the intermediate size"
    nk = I // ti
    gate = w_gate_up[:I].reshape(nk, ti, H)
    up = w_gate_up[I:].reshape(nk, ti, H)
    w_gu_packed = jnp.concatenate([gate, up], axis=1).reshape(2 * I, H)
    w_down_t = jnp.transpose(w_down)
    return w_gu_packed, w_down_t


def _mlp_kernel(x_ref, wgu_ref, wd_ref, o_ref, acc_ref, *, ti):
    """One (token-tile, intermediate-slice) step of the SwiGLU MLP.

    x_ref:   (tm, H)      activations tile (k-invariant, stays resident)
    wgu_ref: (2*ti, H)    packed [gate_k ; up_k] rows of the merged weight
    wd_ref:  (ti, H)      rows of the pre-transposed down-projection weight
    o_ref:   (tm, H)      output tile (resident across the reduction axis)
    acc_ref: (tm, H) f32  VMEM accumulator
    """
    k = pl.program_id(1)

    @pl.when(k == 0)
    def _():
        acc_ref[...] = jnp.zeros_like(acc_ref)

    x = x_ref[...]

    # (tm, H) x (2*ti, H) contracting H -> (tm, 2*ti): gate | up in one MXU pass.
    gu = jax.lax.dot_general(
        x, wgu_ref[...], (((1,), (1,)), ((), ())),
        preferred_element_type=jnp.float32)
    gate = gu[:, :ti]
    up = gu[:, ti:]

    # SiluAndMul: silu(gate) * up   (logistic runs on the EUP slot).
    h = gate * jax.lax.logistic(gate) * up

    # Partial down-projection: (tm, ti) x (ti, H) contracting ti -> (tm, H).
    acc_ref[...] += jax.lax.dot_general(
        h.astype(wd_ref.dtype), wd_ref[...], (((1,), (0,)), ((), ())),
        preferred_element_type=jnp.float32)

    @pl.when(k == pl.num_programs(1) - 1)
    def _():
        o_ref[...] = acc_ref[...].astype(o_ref.dtype)


@functools.partial(jax.jit, static_argnames=("tm", "ti", "vmem_limit"))
def deepseek_v2_mlp(x, w_gu_packed, w_down_t, *, tm, ti, vmem_limit):
    """SwiGLU MLP forward on pre-packed weights (see prepare_deepseek_v2_mlp_weights).

    x:           [T, H]     activations
    w_gu_packed: [2*I, H]   per-ti interleaved [gate_k; up_k] merged weight
    w_down_t:    [I, H]     down-projection weight, transposed to [in, out].T
    """
    T, H = x.shape
    two_I, Hg = w_gu_packed.shape
    I = two_I // 2
    assert Hg == H and w_down_t.shape == (I, H)

    sub = _sublane(x.dtype)
    assert tm % sub == 0, f"tm={tm} must be a multiple of {sub} for dtype {x.dtype}"
    assert I % ti == 0 and (ti % 128 == 0 or ti == I), (
        "intermediate tile must divide I and be a multiple of 128 (or == I)")

    # Ragged token counts: pad instead of shrinking the tile.
    T_pad = _round_up(T, tm)
    x_p = x if T_pad == T else jnp.pad(x, ((0, T_pad - T), (0, 0)))

    nk = I // ti
    grid = (T_pad // tm, nk)

    wsize = jnp.dtype(w_gu_packed.dtype).itemsize
    xsize = jnp.dtype(x.dtype).itemsize
    cost = pl.CostEstimate(
        flops=6 * T_pad * I * H,                        # 4*T*I*H (gate+up) + 2*T*I*H (down)
        transcendentals=T_pad * I,                      # one logistic per (token, i)
        bytes_accessed=(grid[0] * 3 * I * H * wsize     # weights re-streamed per token tile
                        + 2 * T_pad * H * xsize),       # x in + out
    )

    # TODO(synk): on v7x, pipeline_mode=pl.Buffered(1) on the k-invariant x/out
    # specs would shave ~2*tm*H bytes off the 64 MiB budget; left at the default
    # double-buffering for portability.
    out_p = pl.pallas_call(
        functools.partial(_mlp_kernel, ti=ti),
        out_shape=jax.ShapeDtypeStruct((T_pad, H), x.dtype),
        grid_spec=pltpu.PrefetchScalarGridSpec(
            num_scalar_prefetch=0,
            grid=grid,
            in_specs=[
                # x tile: constant across the reduction axis (no re-fetch).
                pl.BlockSpec((tm, H), lambda i, k: (i, 0)),
                # packed gate|up rows: contiguous (2*ti, H) block per k-step.
                pl.BlockSpec((2 * ti, H), lambda i, k: (k, 0)),
                # down-projection rows (pre-transposed [I, H]): contiguous block.
                pl.BlockSpec((ti, H), lambda i, k: (k, 0)),
            ],
            out_specs=pl.BlockSpec((tm, H), lambda i, k: (i, 0)),
            scratch_shapes=[pltpu.VMEM((tm, H), jnp.float32)],
        ),
        compiler_params=pltpu.CompilerParams(
            dimension_semantics=("parallel", "arbitrary"),
            vmem_limit_bytes=vmem_limit,
        ),
        cost_estimate=cost,
    )(x_p, w_gu_packed, w_down_t)

    return out_p[:T] if T_pad != T else out_p


def _reference(x, w_gate_up, w_down):
    gate_up = x @ w_gate_up.T
    I = w_gate_up.shape[0] // 2
    gate, up = gate_up[:, :I], gate_up[:, I:]
    return (jax.nn.silu(gate) * up) @ w_down.T


if __name__ == "__main__":
    # Small shapes consistent with the module: tokens=16, hidden=256, intermediate=512.
    T, H, I = 16, 256, 512
    key = jax.random.PRNGKey(0)
    kx, kg, kd = jax.random.split(key, 3)

    x = jax.random.normal(kx, (T, H), dtype=jnp.float32)
    # Deterministic synthetic parameters, PyTorch nn.Linear convention [out, in].
    w_gate_up = jax.random.normal(kg, (2 * I, H), dtype=jnp.float32) * 0.02
    w_down = jax.random.normal(kd, (H, I), dtype=jnp.float32) * 0.02

    # Device-aware tile selection; then force >= 2 reduction steps at this tiny
    # size so the accumulator init/finalize path and the per-block gate/up
    # packing are both exercised.
    tm, ti = choose_tiles(T, H, I, x.dtype, w_gate_up.dtype)
    ti = min(ti, 256)
    vmem_limit = vmem_limit_for(tm, ti, H, x.dtype, w_gate_up.dtype)

    # One-time weight prep (in production: do this once at weight-load time).
    # TODO(synk): for decode throughput, also cast weights to bf16 (or int8 on
    # v5e/v6e, fp8 on v7x) here; the kernel already accumulates in f32.
    w_gu_packed, w_down_t = prepare_deepseek_v2_mlp_weights(w_gate_up, w_down, ti=ti)

    out = deepseek_v2_mlp(x, w_gu_packed, w_down_t, tm=tm, ti=ti, vmem_limit=vmem_limit)
    out = jax.block_until_ready(out)

    ref = _reference(x, w_gate_up, w_down)
    assert out.shape == (T, H)
    assert jnp.allclose(out, ref, atol=5e-3, rtol=1e-2), "mismatch vs reference"

    # TODO(synk): tensor-parallel all-reduce (RowParallelLinear reduce_results) and
    # the Ascend W8A8 dynamic-quant path (npu_dequant_swiglu_quant) are not modeled;
    # this is the unquantized, single-device forward.
    print("KERNEL_OK")
</pallas_src>

<mosaic_0001>
module attributes {stable_mosaic.version = 11 : i64} {
  func.func @_mlp_kernel(%arg0: i32, %arg1: i32, %arg2: memref<16x256xf32, #tpu.memory_space<vmem>>, %arg3: memref<512x256xf32, #tpu.memory_space<vmem>>, %arg4: memref<256x256xf32, #tpu.memory_space<vmem>>, %arg5: memref<16x256xf32, #tpu.memory_space<vmem>>, %arg6: memref<16x256xf32, #tpu.memory_space<vmem>>) attributes {dimension_semantics = [#tpu.dimension_semantics<parallel>, #tpu.dimension_semantics<arbitrary>], iteration_bounds = array<i64: 1, 2>, scalar_prefetch = 0 : i64, scratch_operands = 1 : i64, tpu.core_type = #tpu.core_type<tc>, window_params = [{transform_indices = @transform_0, window_bounds = array<i64: 16, 256>}, {transform_indices = @transform_1, window_bounds = array<i64: 512, 256>}, {transform_indices = @transform_2, window_bounds = array<i64: 256, 256>}, {transform_indices = @transform_3, window_bounds = array<i64: 16, 256>}]} {
    %c0_i32 = arith.constant 0 : i32
    %0 = arith.cmpi eq, %arg1, %c0_i32 : i32
    %1 = arith.extui %0 : i1 to i32
    %c0_i32_0 = arith.constant 0 : i32
    %2 = arith.cmpi ne, %1, %c0_i32_0 : i32
    scf.if %2 {
      %cst_13 = arith.constant 0.000000e+00 : f32
      %23 = vector.broadcast %cst_13 : f32 to vector<16x256xf32>
      %c0_14 = arith.constant 0 : index
      %c0_15 = arith.constant 0 : index
      %24 = vector.load %arg6[%c0_14, %c0_15] : memref<16x256xf32, #tpu.memory_space<vmem>>, vector<16x256xf32>
      tpu.vector_store %arg6[%c0_14, %c0_15], %23 {strides = array<i32>} : memref<16x256xf32, #tpu.memory_space<vmem>>, vector<16x256xf32>,
    } else {
    }
    %c0 = arith.constant 0 : index
    %c0_1 = arith.constant 0 : index
    %3 = vector.load %arg2[%c0, %c0_1] : memref<16x256xf32, #tpu.memory_space<vmem>>, vector<16x256xf32>
    %c0_2 = arith.constant 0 : index
    %c0_3 = arith.constant 0 : index
    %4 = vector.load %arg3[%c0_2, %c0_3] : memref<512x256xf32, #tpu.memory_space<vmem>>, vector<512x256xf32>
    %cst = arith.constant dense<0.000000e+00> : vector<16x512xf32>
    %5 = tpu.matmul %3, %4, %cst {dimension_numbers = #tpu.dot_dimension_numbers<[1], [1], [0], [0], [0, 0, 1, 0], [], []>} : vector<16x256xf32>, vector<512x256xf32>, vector<16x512xf32> -> vector<16x512xf32>
    %6 = vector.extract_strided_slice %5 {offsets = [0, 0], sizes = [16, 256], strides = [1, 1]} : vector<16x512xf32> to vector<16x256xf32>
    %7 = vector.extract_strided_slice %5 {offsets = [0, 256], sizes = [16, 256], strides = [1, 1]} : vector<16x512xf32> to vector<16x256xf32>
    %8 = arith.negf %6 : vector<16x256xf32>
    %9 = math.exp %8 : vector<16x256xf32>
    %cst_4 = arith.constant 1.000000e+00 : f32
    %10 = vector.broadcast %cst_4 : f32 to vector<16x256xf32>
    %11 = arith.addf %10, %9 : vector<16x256xf32>
    %12 = arith.divf %10, %11 : vector<16x256xf32>
    %13 = arith.mulf %6, %12 : vector<16x256xf32>
    %14 = arith.mulf %13, %7 : vector<16x256xf32>
    %c0_5 = arith.constant 0 : index
    %c0_6 = arith.constant 0 : index
    %15 = vector.load %arg6[%c0_5, %c0_6] : memref<16x256xf32, #tpu.memory_space<vmem>>, vector<16x256xf32>
    %c0_7 = arith.constant 0 : index
    %c0_8 = arith.constant 0 : index
    %16 = vector.load %arg4[%c0_7, %c0_8] : memref<256x256xf32, #tpu.memory_space<vmem>>, vector<256x256xf32>
    %cst_9 = arith.constant dense<0.000000e+00> : vector<16x256xf32>
    %17 = tpu.matmul %14, %16, %cst_9 {dimension_numbers = #tpu.dot_dimension_numbers<[1], [0], [0], [1], [0, 0, 1, 1], [], []>} : vector<16x256xf32>, vector<256x256xf32>, vector<16x256xf32> -> vector<16x256xf32>
    %18 = arith.addf %15, %17 : vector<16x256xf32>
    %c0_10 = arith.constant 0 : index
    %c0_11 = arith.constant 0 : index
    %19 = vector.load %arg6[%c0_10, %c0_11] : memref<16x256xf32, #tpu.memory_space<vmem>>, vector<16x256xf32>
    tpu.vector_store %arg6[%c0_10, %c0_11], %18 {strides = array<i32>} : memref<16x256xf32, #tpu.memory_space<vmem>>, vector<16x256xf32>,
    %c1_i32 = arith.constant 1 : i32
    %20 = arith.cmpi eq, %arg1, %c1_i32 : i32
    %21 = arith.extui %20 : i1 to i32
    %c0_i32_12 = arith.constant 0 : i32
    %22 = arith.cmpi ne, %21, %c0_i32_12 : i32
    scf.if %22 {
      %c0_13 = arith.constant 0 : index
      %c0_14 = arith.constant 0 : index
      %23 = vector.load %arg6[%c0_13, %c0_14] : memref<16x256xf32, #tpu.memory_space<vmem>>, vector<16x256xf32>
      %c0_15 = arith.constant 0 : index
      %c0_16 = arith.constant 0 : index
      %24 = vector.load %arg5[%c0_15, %c0_16] : memref<16x256xf32, #tpu.memory_space<vmem>>, vector<16x256xf32>
      tpu.vector_store %arg5[%c0_15, %c0_16], %23 {strides = array<i32>} : memref<16x256xf32, #tpu.memory_space<vmem>>, vector<16x256xf32>,
    } else {
    }
    return
  }
  func.func @transform_0(%arg0: i32, %arg1: i32) -> (i32, i32) {
    %c0_i32 = arith.constant 0 : i32
    %c0_i32_0 = arith.constant 0 : i32
    return %arg0, %c0_i32 : i32, i32
  }
  func.func @transform_1(%arg0: i32, %arg1: i32) -> (i32, i32) {
    %c0_i32 = arith.constant 0 : i32
    %c0_i32_0 = arith.constant 0 : i32
    return %arg1, %c0_i32 : i32, i32
  }
  func.func @transform_2(%arg0: i32, %arg1: i32) -> (i32, i32) {
    %c0_i32 = arith.constant 0 : i32
    %c0_i32_0 = arith.constant 0 : i32
    return %arg1, %c0_i32 : i32, i32
  }
  func.func @transform_3(%arg0: i32, %arg1: i32) -> (i32, i32) {
    %c0_i32 = arith.constant 0 : i32
    %c0_i32_0 = arith.constant 0 : i32
    return %arg0, %c0_i32 : i32, i32
  }
}

</mosaic_0001>

<llo_original>
// kernel: deepseek_v2_mlp.1
$region0: #{deepseek_v2_mlp.1}
  #allocation0 [shape = 'u32[]', space=smem, size = 0x4, offset = 0x4, fixed_abs, tag = 'smem constant byte address 0x4 - core index']
  #allocation1 [shape = 'u32[144,128]{1,0:T(1,128)}', space=vmem, size = 0x12000, scoped, tag = 'internal scratch']
  #allocation2 [shape = 'f32[16,256]{1,0:T(8,128)}', space=vmem, size = 0x4000, scoped, tag = 'scratch operand']
  %s0 = inlined_call_operand.hbm [shape: f32[16,256], index: 0, kind: input, shape index: {}]
  %s1 = inlined_call_operand.hbm [shape: f32[1024,256], index: 1, kind: input, shape index: {}]
  %s2 = inlined_call_operand.hbm [shape: f32[512,256], index: 2, kind: input, shape index: {}]
  %s3 = inlined_call_operand.hbm [shape: f32[16,256], index: 3, kind: output, shape index: {}]
  %s4 = sld [smem:[#allocation0]]
  $region65: #{deepseek_v2_mlp.1} parent=0
    _
  %s6 = ssub.s32 1, %s4
  %s7 = scalar_select 0, %s6, %s4
  $region1: #{deepseek_v2_mlp.1} parent=0
    #allocation3 [shape = 'u8[16384]{0}', space=vmem, size = 0x4000, scoped, tag = 'input window, operand 0, single buffered']
    #allocation4 [shape = 's32[2]{0}', space=sflag, size = 0x8, scoped, tag = 'scoped memory for deepseek_v2_mlp.1']
    #allocation5 [shape = 's32[2]{0}', space=sflag, size = 0x8, scoped, tag = 'scoped memory for deepseek_v2_mlp.1']
    #allocation6 [shape = 'u8[1048576]{0}', space=vmem, size = 0x100000, scoped, tag = 'input window, operand 1']
    #allocation7 [shape = 's32[2]{0}', space=sflag, size = 0x8, scoped, tag = 'scoped memory for deepseek_v2_mlp.1']
    #allocation8 [shape = 'u8[524288]{0}', space=vmem, size = 0x80000, scoped, tag = 'input window, operand 2']
    #allocation9 [shape = 'u8[16384]{0}', space=vmem, size = 0x4000, scoped, tag = 'output window, operand 0, single buffered']
    %8 = vsyncpa [#allocation4], 0
    %9 = vsyncpa [#allocation7], 0
    %s10 = scalar_lea.sflag [#allocation7], 1
    %11 = vsyncpa %s10, 0
    %12 = vsyncpa [#allocation5], 0
    loop: start=0, step=1, limit=4
    $region2: #{deepseek_v2_mlp.1} parent=1 // loop_pre_header
      _
    $region3: #{deepseek_v2_mlp.1} parent=1 // loop_header
      %s14 = sphi 0, %s18
      %p15 = scmp.ge.s32.totalorder %s14, 4
      %s21 = sphi 0, %s33
      %s22 = sphi 0, %s29
      %s23 = sphi 0, %s21
      %s24 = sphi 0, %s22
      %s25 = sphi 0, %s23
      %s26 = sphi 0, %s24
      %s36 = sphi 0, %s38
      %s39 = sphi 0, %s36
      %s40 = sphi 0, %s39
      %s56 = sphi 0, %s40
      %s62 = sphi 0, %s64
      %s65 = sphi 0, %s62
      %s66 = sphi 0, %s65
      %s82 = sphi 0, %s66
      %s88 = sphi 0, %s90
      %s91 = sphi 0, %s88
      %s92 = sphi 0, %s91
      %s108 = sphi 0, %s92
      %s114 = sphi 0, %s116
      %s117 = sphi 0, %s114
      %s118 = sphi 0, %s117
      %s134 = sphi 0, %s118
    $region4: #{deepseek_v2_mlp.1} parent=1 // loop_header_branch
      %17 = sbr.rel (%p15) target = $region8
    $region5: #{deepseek_v2_mlp.1} parent=1 // loop_body
      %s19 = ssub.s32 %s14, 1
      %s20 = ssub.s32 %s14, 2
      %s27 = sadd.s32 1, %s22
      %p28 = scmp.ge.s32.totalorder %s27, 2
      %s29 = scalar_select %p28, 0, %s27
      %s30 = sadd.s32 1, %s21
      %s31 = scalar_select %p28, %s30, %s21
      %p32 = scmp.ge.s32.totalorder %s31, 1
      %s33 = scalar_select %p32, 0, %s31
      %s34 = ssub.s32 %s21, %s33
      %p35 = scmp.eq.s32.totalorder %s34, 0
      %s37 = sadd.s32 %s36, 1
      %s38 = scalar_select %p35, %s36, %s37
      %p41 = pneg %p35
      %p42 = scmp.eq.s32.totalorder %s14, 1
      %p43 = por %p41, %p42
      %p44 = scmp.ne.s32.totalorder %s36, %s39
      %p45 = scmp.eq.s32.totalorder %s14, 0
      %p46 = por %p44, %p45
      %p47 = scmp.ne.s32.totalorder %s36, %s39
      %p48 = scmp.eq.s32.totalorder %s19, 1
      %p49 = por %p47, %p48
      %p50 = scmp.ne.s32.totalorder %s39, %s40
      %p51 = scmp.eq.s32.totalorder %s19, 0
      %p52 = por %p50, %p51
      %p53 = scmp.ne.s32.totalorder %s39, %s40
      %p54 = scmp.eq.s32.totalorder %s20, 1
      %p55 = por %p53, %p54
      %p57 = scmp.ne.s32.totalorder %s40, %s56
      %p58 = scmp.eq.s32.totalorder %s20, 0
      %p59 = por %p57, %p58
      %s60 = ssub.s32 %s22, %s29
      %p61 = scmp.eq.s32.totalorder %s60, 0
      %s63 = sadd.s32 %s62, 1
      %s64 = scalar_select %p61, %s62, %s63
      %p67 = pneg %p61
      %p68 = scmp.eq.s32.totalorder %s14, 1
      %p69 = por %p67, %p68
      %p70 = scmp.ne.s32.totalorder %s62, %s65
      %p71 = scmp.eq.s32.totalorder %s14, 0
      %p72 = por %p70, %p71
      %p73 = scmp.ne.s32.totalorder %s62, %s65
      %p74 = scmp.eq.s32.totalorder %s19, 1
      %p75 = por %p73, %p74
      %p76 = scmp.ne.s32.totalorder %s65, %s66
      %p77 = scmp.eq.s32.totalorder %s19, 0
      %p78 = por %p76, %p77
      %p79 = scmp.ne.s32.totalorder %s65, %s66
      %p80 = scmp.eq.s32.totalorder %s20, 1
      %p81 = por %p79, %p80
      %p83 = scmp.ne.s32.totalorder %s66, %s82
      %p84 = scmp.eq.s32.totalorder %s20, 0
      %p85 = por %p83, %p84
      %s86 = ssub.s32 %s22, %s29
      %p87 = scmp.eq.s32.totalorder %s86, 0
      %s89 = sadd.s32 %s88, 1
      %s90 = scalar_select %p87, %s88, %s89
      %p93 = pneg %p87
      %p94 = scmp.eq.s32.totalorder %s14, 1
      %p95 = por %p93, %p94
      %p96 = scmp.ne.s32.totalorder %s88, %s91
      %p97 = scmp.eq.s32.totalorder %s14, 0
      %p98 = por %p96, %p97
      %p99 = scmp.ne.s32.totalorder %s88, %s91
      %p100 = scmp.eq.s32.totalorder %s19, 1
      %p101 = por %p99, %p100
      %p102 = scmp.ne.s32.totalorder %s91, %s92
      %p103 = scmp.eq.s32.totalorder %s19, 0
      %p104 = por %p102, %p103
      %p105 = scmp.ne.s32.totalorder %s91, %s92
      %p106 = scmp.eq.s32.totalorder %s20, 1
      %p107 = por %p105, %p106
      %p109 = scmp.ne.s32.totalorder %s92, %s108
      %p110 = scmp.eq.s32.totalorder %s20, 0
      %p111 = por %p109, %p110
      %s112 = ssub.s32 %s21, %s33
      %p113 = scmp.eq.s32.totalorder %s112, 0
      %s115 = sadd.s32 %s114, 1
      %s116 = scalar_select %p113, %s114, %s115
      %p119 = pneg %p113
      %p120 = scmp.eq.s32.totalorder %s14, 1
      %p121 = por %p119, %p120
      %p122 = scmp.ne.s32.totalorder %s114, %s117
      %p123 = scmp.eq.s32.totalorder %s14, 0
      %p124 = por %p122, %p123
      %p125 = scmp.ne.s32.totalorder %s114, %s117
      %p126 = scmp.eq.s32.totalorder %s19, 1
      %p127 = por %p125, %p126
      %p128 = scmp.ne.s32.totalorder %s117, %s118
      %p129 = scmp.eq.s32.totalorder %s19, 0
      %p130 = por %p128, %p129
      %p131 = scmp.ne.s32.totalorder %s117, %s118
      %p132 = scmp.eq.s32.totalorder %s20, 1
      %p133 = por %p131, %p132
      %p135 = scmp.ne.s32.totalorder %s118, %s134
      %p136 = scmp.eq.s32.totalorder %s20, 0
      %p137 = por %p135, %p136
      %p138 = scmp.le.s32.totalorder 1, %s14
      %p139 = scmp.lt.s32.totalorder %s14, 3
      %p140 = pnand %p138, %p139
      %p141 = pneg %p140
      // Predicated region
      $region9: #{deepseek_v2_mlp.1} parent=5 // pred_check
        _
      $region10: #{deepseek_v2_mlp.1} parent=5 // pred_check_branch
        %143 = sbr.rel (%p140) target = $region12
      $region11: #{deepseek_v2_mlp.1} parent=5 // pred_region
        %s144 = ssub.s32 %s14, 1
        // Predicated region
        $region13: #{deepseek_v2_mlp.1} parent=11 // pred_check
          %p145 = pneg %p52
        $region14: #{deepseek_v2_mlp.1} parent=11 // pred_check_branch
          %147 = sbr.rel (%p145) target = $region16
        $region15: #{deepseek_v2_mlp.1} parent=11 // pred_region
          %s148 = smul.u32 2, %s23
          %s150 = ssub.s32 512, 512
          %151 = vsyncadd [#allocation4], %s150
          %s152 = smul.addr %s148, 2
          %s153 = smul.addr %s152, 128
          %s154 = scalar_lea.hbm %s0, %s153
          %s155 = sshll.u32 [#allocation3], 4
          %s156 = int_to_ptr.vmem [resolvable:$true] %s155
          %161 = dma.hbm_to_vmem [thread:$0]  %s154, 512, %s156, [#allocation4], 256, 256, 16
        $region16: #{deepseek_v2_mlp.1} parent=11 // pred_fallthru
          _
      $region12: #{deepseek_v2_mlp.1} parent=5 // pred_fallthru
        _
      %p162 = scmp.lt.s32.totalorder %s14, 2
      // Predicated region
      $region17: #{deepseek_v2_mlp.1} parent=5 // pred_check
        %p163 = pneg %p162
      $region18: #{deepseek_v2_mlp.1} parent=5 // pred_check_branch
        %165 = sbr.rel (%p163) target = $region20
      $region19: #{deepseek_v2_mlp.1} parent=5 // pred_region
        // Predicated region
        $region21: #{deepseek_v2_mlp.1} parent=19 // pred_check
          %p166 = pneg %p72
        $region22: #{deepseek_v2_mlp.1} parent=19 // pred_check_branch
          %168 = sbr.rel (%p166) target = $region24
        $region23: #{deepseek_v2_mlp.1} parent=19 // pred_region
          %s169 = sand.u32 %s14, 1
          %s170 = scalar_lea.sflag [#allocation7], %s169
          %s171 = sand.u32 %s62, 1
          %s172 = smul.addr %s171, 1024
          %s173 = scalar_lea.vmem [#allocation6], %s172
          %s174 = smul.u32 64, %s22
          %s176 = ssub.s32 16384, 16384
          %177 = vsyncadd %s170, %s176
          %s178 = smul.addr %s174, 2
          %s179 = smul.addr %s178, 128
          %s180 = scalar_lea.hbm %s1, %s179
          %s181 = sshll.u32 %s173, 4
          %s182 = int_to_ptr.vmem [resolvable:$true] %s181
          %187 = dma.hbm_to_vmem [thread:$0]  %s180, 16384, %s182, %s170, 256, 256, 16
        $region24: #{deepseek_v2_mlp.1} parent=19 // pred_fallthru
          _
        // Predicated region
        $region25: #{deepseek_v2_mlp.1} parent=19 // pred_check
          %p188 = pneg %p98
        $region26: #{deepseek_v2_mlp.1} parent=19 // pred_check_branch
          %190 = sbr.rel (%p188) target = $region28
        $region27: #{deepseek_v2_mlp.1} parent=19 // pred_region
          %s191 = sand.u32 %s14, 1
          %s192 = scalar_lea.sflag [#allocation7], %s191
          %s193 = sand.u32 %s88, 1
          %s194 = smul.addr %s193, 512
          %s195 = scalar_lea.vmem [#allocation8], %s194
          %s196 = smul.u32 32, %s22
          %s198 = ssub.s32 8192, 8192
          %199 = vsyncadd %s192, %s198
          %s200 = smul.addr %s196, 2
          %s201 = smul.addr %s200, 128
          %s202 = scalar_lea.hbm %s2, %s201
          %s203 = sshll.u32 %s195, 4
          %s204 = int_to_ptr.vmem [resolvable:$true] %s203
          %209 = dma.hbm_to_vmem [thread:$0]  %s202, 8192, %s204, %s192, 256, 256, 16
        $region28: #{deepseek_v2_mlp.1} parent=19 // pred_fallthru
          _
      $region20: #{deepseek_v2_mlp.1} parent=5 // pred_fallthru
        _
      %p210 = scmp.le.s32.totalorder 1, %s14
      %p211 = scmp.lt.s32.totalorder %s14, 3
      %p212 = pnand %p210, %p211
      %p213 = pneg %p212
      // Predicated region
      $region29: #{deepseek_v2_mlp.1} parent=5 // pred_check
        _
      $region30: #{deepseek_v2_mlp.1} parent=5 // pred_check_branch
        %215 = sbr.rel (%p212) target = $region32
      $region31: #{deepseek_v2_mlp.1} parent=5 // pred_region
        %s216 = ssub.s32 %s14, 1
        // Predicated region
        $region33: #{deepseek_v2_mlp.1} parent=31 // pred_check
          %p217 = pneg %p52
        $region34: #{deepseek_v2_mlp.1} parent=31 // pred_check_branch
          %219 = sbr.rel (%p217) target = $region36
        $region35: #{deepseek_v2_mlp.1} parent=31 // pred_region
          %220 = dma.done [#allocation4], 512
        $region36: #{deepseek_v2_mlp.1} parent=31 // pred_fallthru
          _
        %s221 = sand.u32 %s19, 1
        %s222 = scalar_lea.sflag [#allocation7], %s221
        %s223 = sand.u32 %s65, 1
        %s224 = smul.addr %s223, 1024
        %s225 = scalar_lea.vmem [#allocation6], %s224
        // Predicated region
        $region37: #{deepseek_v2_mlp.1} parent=31 // pred_check
          %p226 = pneg %p78
        $region38: #{deepseek_v2_mlp.1} parent=31 // pred_check_branch
          %228 = sbr.rel (%p226) target = $region40
        $region39: #{deepseek_v2_mlp.1} parent=31 // pred_region
          %229 = dma.done %s222, 16384
        $region40: #{deepseek_v2_mlp.1} parent=31 // pred_fallthru
          _
        %s230 = sand.u32 %s19, 1
        %s231 = scalar_lea.sflag [#allocation7], %s230
        %s232 = sand.u32 %s91, 1
        %s233 = smul.addr %s232, 512
        %s234 = scalar_lea.vmem [#allocation8], %s233
        // Predicated region
        $region41: #{deepseek_v2_mlp.1} parent=31 // pred_check
          %p235 = pneg %p104
        $region42: #{deepseek_v2_mlp.1} parent=31 // pred_check_branch
          %237 = sbr.rel (%p235) target = $region44
        $region43: #{deepseek_v2_mlp.1} parent=31 // pred_region
          %238 = dma.done %s231, 8192
        $region44: #{deepseek_v2_mlp.1} parent=31 // pred_fallthru
          _
        %p239 = pneg %p52
        %p240 = pneg %p49
        %s241 = sand.u32 %s19, 1
        %s242 = scalar_lea.sflag [#allocation7], %s241
        %s243 = sand.u32 %s65, 1
        %s244 = smul.addr %s243, 1024
        %s245 = scalar_lea.vmem [#allocation6], %s244
        %p246 = pneg %p78
        %p247 = pneg %p75
        %s248 = sand.u32 %s19, 1
        %s249 = scalar_lea.sflag [#allocation7], %s248
        %s250 = sand.u32 %s91, 1
        %s251 = smul.addr %s250, 512
        %s252 = scalar_lea.vmem [#allocation8], %s251
        %p253 = pneg %p104
        %p254 = pneg %p101
        %p255 = pneg %p130
        %p256 = pneg %p127
        %s257 = smul.u32 2, %s23
        %s258 = smul.u32 64, %s24
        %s259 = smul.u32 32, %s24
        %s260 = smul.u32 2, %s23
        %p261 = scmp.eq.s32.totalorder %s24, 0
        // Predicated region
        $region45: #{deepseek_v2_mlp.1} parent=31 // pred_check
          %p262 = pneg %p261
        $region46: #{deepseek_v2_mlp.1} parent=31 // pred_check_branch
          %264 = sbr.rel (%p262) target = $region48
        $region47: #{deepseek_v2_mlp.1} parent=31 // pred_region
          %265 = vst [vmem:[#allocation2] sm:$0xff] 0.0
          %266 = vst [vmem:[#allocation2 + $0x8] sm:$0xff] 0.0
          %267 = vst [vmem:[#allocation2 + $0x10] sm:$0xff] 0.0
          %268 = vst [vmem:[#allocation2 + $0x18] sm:$0xff] 0.0
        $region48: #{deepseek_v2_mlp.1} parent=31 // pred_fallthru
          _
        %v269 = vld [vmem:[#allocation3] sm:$0xff]
        %v270 = vld [vmem:[#allocation3 + $0x8] sm:$0xff]
        %v271 = vld [vmem:[#allocation3 + $0x10] sm:$0xff]
        %v272 = vld [vmem:[#allocation3 + $0x18] sm:$0xff]
        %v273 = vld [vmem:[%s225] sm:$0xff]
        %v274 = vld [vmem:[%s225 + $0x8] sm:$0xff]
        %v275 = vld [vmem:[%s225 + $0x10] sm:$0xff]
        %v276 = vld [vmem:[%s225 + $0x18] sm:$0xff]
        %v277 = vld [vmem:[%s225 + $0x20] sm:$0xff]
        %v278 = vld [vmem:[%s225 + $0x28] sm:$0xff]
        %v279 = vld [vmem:[%s225 + $0x30] sm:$0xff]
        %v280 = vld [vmem:[%s225 + $0x38] sm:$0xff]
        %v281 = vld [vmem:[%s225 + $0x40] sm:$0xff]
        %v282 = vld [vmem:[%s225 + $0x48] sm:$0xff]
        %v283 = vld [vmem:[%s225 + $0x50] sm:$0xff]
        %v284 = vld [vmem:[%s225 + $0x58] sm:$0xff]
        %v285 = vld [vmem:[%s225 + $0x60] sm:$0xff]
        %v286 = vld [vmem:[%s225 + $0x68] sm:$0xff]
        %v287 = vld [vmem:[%s225 + $0x70] sm:$0xff]
        %v288 = vld [vmem:[%s225 + $0x78] sm:$0xff]
        %v289 = vld [vmem:[%s225 + $0x80] sm:$0xff]
        %v290 = vld [vmem:[%s225 + $0x88] sm:$0xff]
        %v291 = vld [vmem:[%s225 + $0x90] sm:$0xff]
        %v292 = vld [vmem:[%s225 + $0x98] sm:$0xff]
        %v293 = vld [vmem:[%s225 + $0xa0] sm:$0xff]
        %v294 = vld [vmem:[%s225 + $0xa8] sm:$0xff]
        %v295 = vld [vmem:[%s225 + $0xb0] sm:$0xff]
        %v296 = vld [vmem:[%s225 + $0xb8] sm:$0xff]
        %v297 = vld [vmem:[%s225 + $0xc0] sm:$0xff]
        %v298 = vld [vmem:[%s225 + $0xc8] sm:$0xff]
        %v299 = vld [vmem:[%s225 + $0xd0] sm:$0xff]
        %v300 = vld [vmem:[%s225 + $0xd8] sm:$0xff]
        %v301 = vld [vmem:[%s225 + $0xe0] sm:$0xff]
        %v302 = vld [vmem:[%s225 + $0xe8] sm:$0xff]
        %v303 = vld [vmem:[%s225 + $0xf0] sm:$0xff]
        %v304 = vld [vmem:[%s225 + $0xf8] sm:$0xff]
        %v305 = vld [vmem:[%s225 + $0x100] sm:$0xff]
        %v306 = vld [vmem:[%s225 + $0x108] sm:$0xff]
        %v307 = vld [vmem:[%s225 + $0x110] sm:$0xff]
        %v308 = vld [vmem:[%s225 + $0x118] sm:$0xff]
        %v309 = vld [vmem:[%s225 + $0x120] sm:$0xff]
        %v310 = vld [vmem:[%s225 + $0x128] sm:$0xff]
        %v311 = vld [vmem:[%s225 + $0x130] sm:$0xff]
        %v312 = vld [vmem:[%s225 + $0x138] sm:$0xff]
        %v313 = vld [vmem:[%s225 + $0x140] sm:$0xff]
        %v314 = vld [vmem:[%s225 + $0x148] sm:$0xff]
        %v315 = vld [vmem:[%s225 + $0x150] sm:$0xff]
        %v316 = vld [vmem:[%s225 + $0x158] sm:$0xff]
        %v317 = vld [vmem:[%s225 + $0x160] sm:$0xff]
        %v318 = vld [vmem:[%s225 + $0x168] sm:$0xff]
        %v319 = vld [vmem:[%s225 + $0x170] sm:$0xff]
        %v320 = vld [vmem:[%s225 + $0x178] sm:$0xff]
        %v321 = vld [vmem:[%s225 + $0x180] sm:$0xff]
        %v322 = vld [vmem:[%s225 + $0x188] sm:$0xff]
        %v323 = vld [vmem:[%s225 + $0x190] sm:$0xff]
        %v324 = vld [vmem:[%s225 + $0x198] sm:$0xff]
        %v325 = vld [vmem:[%s225 + $0x1a0] sm:$0xff]
        %v326 = vld [vmem:[%s225 + $0x1a8] sm:$0xff]
        %v327 = vld [vmem:[%s225 + $0x1b0] sm:$0xff]
        %v328 = vld [vmem:[%s225 + $0x1b8] sm:$0xff]
        %v329 = vld [vmem:[%s225 + $0x1c0] sm:$0xff]
        %v330 = vld [vmem:[%s225 + $0x1c8] sm:$0xff]
        %v331 = vld [vmem:[%s225 + $0x1d0] sm:$0xff]
        %v332 = vld [vmem:[%s225 + $0x1d8] sm:$0xff]
        %v333 = vld [vmem:[%s225 + $0x1e0] sm:$0xff]
        %v334 = vld [vmem:[%s225 + $0x1e8] sm:$0xff]
        %v335 = vld [vmem:[%s225 + $0x1f0] sm:$0xff]
        %v336 = vld [vmem:[%s225 + $0x1f8] sm:$0xff]
        %v337 = vld [vmem:[%s225 + $0x200] sm:$0xff]
        %v338 = vld [vmem:[%s225 + $0x208] sm:$0xff]
        %v339 = vld [vmem:[%s225 + $0x210] sm:$0xff]
        %v340 = vld [vmem:[%s225 + $0x218] sm:$0xff]
        %v341 = vld [vmem:[%s225 + $0x220] sm:$0xff]
        %v342 = vld [vmem:[%s225 + $0x228] sm:$0xff]
        %v343 = vld [vmem:[%s225 + $0x230] sm:$0xff]
        %v344 = vld [vmem:[%s225 + $0x238] sm:$0xff]
        %v345 = vld [vmem:[%s225 + $0x240] sm:$0xff]
        %v346 = vld [vmem:[%s225 + $0x248] sm:$0xff]
        %v347 = vld [vmem:[%s225 + $0x250] sm:$0xff]
        %v348 = vld [vmem:[%s225 + $0x258] sm:$0xff]
        %v349 = vld [vmem:[%s225 + $0x260] sm:$0xff]
        %v350 = vld [vmem:[%s225 + $0x268] sm:$0xff]
        %v351 = vld [vmem:[%s225 + $0x270] sm:$0xff]
        %v352 = vld [vmem:[%s225 + $0x278] sm:$0xff]
        %v353 = vld [vmem:[%s225 + $0x280] sm:$0xff]
        %v354 = vld [vmem:[%s225 + $0x288] sm:$0xff]
        %v355 = vld [vmem:[%s225 + $0x290] sm:$0xff]
        %v356 = vld [vmem:[%s225 + $0x298] sm:$0xff]
        %v357 = vld [vmem:[%s225 + $0x2a0] sm:$0xff]
        %v358 = vld [vmem:[%s225 + $0x2a8] sm:$0xff]
        %v359 = vld [vmem:[%s225 + $0x2b0] sm:$0xff]
        %v360 = vld [vmem:[%s225 + $0x2b8] sm:$0xff]
        %v361 = vld [vmem:[%s225 + $0x2c0] sm:$0xff]
        %v362 = vld [vmem:[%s225 + $0x2c8] sm:$0xff]
        %v363 = vld [vmem:[%s225 + $0x2d0] sm:$0xff]
        %v364 = vld [vmem:[%s225 + $0x2d8] sm:$0xff]
        %v365 = vld [vmem:[%s225 + $0x2e0] sm:$0xff]
        %v366 = vld [vmem:[%s225 + $0x2e8] sm:$0xff]
        %v367 = vld [vmem:[%s225 + $0x2f0] sm:$0xff]
        %v368 = vld [vmem:[%s225 + $0x2f8] sm:$0xff]
        %v369 = vld [vmem:[%s225 + $0x300] sm:$0xff]
        %v370 = vld [vmem:[%s225 + $0x308] sm:$0xff]
        %v371 = vld [vmem:[%s225 + $0x310] sm:$0xff]
        %v372 = vld [vmem:[%s225 + $0x318] sm:$0xff]
        %v373 = vld [vmem:[%s225 + $0x320] sm:$0xff]
        %v374 = vld [vmem:[%s225 + $0x328] sm:$0xff]
        %v375 = vld [vmem:[%s225 + $0x330] sm:$0xff]
        %v376 = vld [vmem:[%s225 + $0x338] sm:$0xff]
        %v377 = vld [vmem:[%s225 + $0x340] sm:$0xff]
        %v378 = vld [vmem:[%s225 + $0x348] sm:$0xff]
        %v379 = vld [vmem:[%s225 + $0x350] sm:$0xff]
        %v380 = vld [vmem:[%s225 + $0x358] sm:$0xff]
        %v381 = vld [vmem:[%s225 + $0x360] sm:$0xff]
        %v382 = vld [vmem:[%s225 + $0x368] sm:$0xff]
        %v383 = vld [vmem:[%s225 + $0x370] sm:$0xff]
        %v384 = vld [vmem:[%s225 + $0x378] sm:$0xff]
        %v385 = vld [vmem:[%s225 + $0x380] sm:$0xff]
        %v386 = vld [vmem:[%s225 + $0x388] sm:$0xff]
        %v387 = vld [vmem:[%s225 + $0x390] sm:$0xff]
        %v388 = vld [vmem:[%s225 + $0x398] sm:$0xff]
        %v389 = vld [vmem:[%s225 + $0x3a0] sm:$0xff]
        %v390 = vld [vmem:[%s225 + $0x3a8] sm:$0xff]
        %v391 = vld [vmem:[%s225 + $0x3b0] sm:$0xff]
        %v392 = vld [vmem:[%s225 + $0x3b8] sm:$0xff]
        %v393 = vld [vmem:[%s225 + $0x3c0] sm:$0xff]
        %v394 = vld [vmem:[%s225 + $0x3c8] sm:$0xff]
        %v395 = vld [vmem:[%s225 + $0x3d0] sm:$0xff]
        %v396 = vld [vmem:[%s225 + $0x3d8] sm:$0xff]
        %v397 = vld [vmem:[%s225 + $0x3e0] sm:$0xff]
        %v398 = vld [vmem:[%s225 + $0x3e8] sm:$0xff]
        %v399 = vld [vmem:[%s225 + $0x3f0] sm:$0xff]
        %v400 = vld [vmem:[%s225 + $0x3f8] sm:$0xff]
        %401 = vmatprep.subr.mxu0 %v274
        %402 = vmatpush1.xpose.msra.mxu0 %v273
        %403 = vmatprep.subr.mxu0 %v276
        %404 = vmatpush1.xpose.msra.mxu0 %v275
        %405 = vmatprep.subr.mxu0 %v278
        %406 = vmatpush1.xpose.msra.mxu0 %v277
        %407 = vmatprep.subr.mxu0 %v280
        %408 = vmatpush1.xpose.msra.mxu0 %v279
        %409 = vmatprep.subr.mxu0 %v282
        %410 = vmatpush1.xpose.msra.mxu0 %v281
        %411 = vmatprep.subr.mxu0 %v284
        %412 = vmatpush1.xpose.msra.mxu0 %v283
        %413 = vmatprep.subr.mxu0 %v286
        %414 = vmatpush1.xpose.msra.mxu0 %v285
        %415 = vmatprep.subr.mxu0 %v288
        %416 = vmatpush1.xpose.msra.mxu0 %v287
        %417 = vmatprep.subr.mxu0 %v290
        %418 = vmatpush1.xpose.msra.mxu0 %v289
        %419 = vmatprep.subr.mxu0 %v292
        %420 = vmatpush1.xpose.msra.mxu0 %v291
        %421 = vmatprep.subr.mxu0 %v294
        %422 = vmatpush1.xpose.msra.mxu0 %v293
        %423 = vmatprep.subr.mxu0 %v296
        %424 = vmatpush1.xpose.msra.mxu0 %v295
        %425 = vmatprep.subr.mxu0 %v298
        %426 = vmatpush1.xpose.msra.mxu0 %v297
        %427 = vmatprep.subr.mxu0 %v300
        %428 = vmatpush1.xpose.msra.mxu0 %v299
        %429 = vmatprep.subr.mxu0 %v302
        %430 = vmatpush1.xpose.msra.mxu0 %v301
        %431 = vmatprep.subr.mxu0 %v304
        %432 = vmatpush1.xpose.msra.mxu0 %v303
        %433 = vmatprep.subr.mxu0 %v306
        %434 = vmatpush1.xpose.msra.mxu0 %v305
        %435 = vmatprep.subr.mxu0 %v308
        %436 = vmatpush1.xpose.msra.mxu0 %v307
        %437 = vmatprep.subr.mxu0 %v310
        %438 = vmatpush1.xpose.msra.mxu0 %v309
        %439 = vmatprep.subr.mxu0 %v312
        %440 = vmatpush1.xpose.msra.mxu0 %v311
        %441 = vmatprep.subr.mxu0 %v314
        %442 = vmatpush1.xpose.msra.mxu0 %v313
        %443 = vmatprep.subr.mxu0 %v316
        %444 = vmatpush1.xpose.msra.mxu0 %v315
        %445 = vmatprep.subr.mxu0 %v318
        %446 = vmatpush1.xpose.msra.mxu0 %v317
        %447 = vmatprep.subr.mxu0 %v320
        %448 = vmatpush1.xpose.msra.mxu0 %v319
        %449 = vmatprep.subr.mxu0 %v322
        %450 = vmatpush1.xpose.msra.mxu0 %v321
        %451 = vmatprep.subr.mxu0 %v324
        %452 = vmatpush1.xpose.msra.mxu0 %v323
        %453 = vmatprep.subr.mxu0 %v326
        %454 = vmatpush1.xpose.msra.mxu0 %v325
        %455 = vmatprep.subr.mxu0 %v328
        %456 = vmatpush1.xpose.msra.mxu0 %v327
        %457 = vmatprep.subr.mxu0 %v330
        %458 = vmatpush1.xpose.msra.mxu0 %v329
        %459 = vmatprep.subr.mxu0 %v332
        %460 = vmatpush1.xpose.msra.mxu0 %v331
        %461 = vmatprep.subr.mxu0 %v334
        %462 = vmatpush1.xpose.msra.mxu0 %v333
        %463 = vmatprep.subr.mxu0 %v336
        %464 = vmatpush1.xpose.msra.mxu0 %v335
        %465 = vmatprep.mubr.f32.mxu0 %v270
        %466 = vmatmul.mubr.f32.gmra.mrb[0].mxu0 %v269
        %v467 = vpop.f32.mrb[0].mxu0
        %v468 = vadd.f32 0.0, %v467
        %v469 = vpop.f32.mrb[0].mxu0
        %v470 = vadd.f32 0.0, %v469
        %471 = vmatprep.mubr.f32.mxu0 %v272
        %472 = vmatmul.mubr.f32.gmra.mrb[0].mxu0 %v271
        %v473 = vpop.f32.mrb[0].mxu0
        %v474 = vadd.f32 0.0, %v473
        %v475 = vpop.f32.mrb[0].mxu0
        %v476 = vadd.f32 0.0, %v475
        %477 = vdwg.mxu0
        %478 = vmatprep.subr.mxu0 %v338
        %479 = vmatpush1.xpose.msra.mxu0 %v337
        %480 = vmatprep.subr.mxu0 %v340
        %481 = vmatpush1.xpose.msra.mxu0 %v339
        %482 = vmatprep.subr.mxu0 %v342
        %483 = vmatpush1.xpose.msra.mxu0 %v341
        %484 = vmatprep.subr.mxu0 %v344
        %485 = vmatpush1.xpose.msra.mxu0 %v343
        %486 = vmatprep.subr.mxu0 %v346
        %487 = vmatpush1.xpose.msra.mxu0 %v345
        %488 = vmatprep.subr.mxu0 %v348
        %489 = vmatpush1.xpose.msra.mxu0 %v347
        %490 = vmatprep.subr.mxu0 %v350
        %491 = vmatpush1.xpose.msra.mxu0 %v349
        %492 = vmatprep.subr.mxu0 %v352
        %493 = vmatpush1.xpose.msra.mxu0 %v351
        %494 = vmatprep.subr.mxu0 %v354
        %495 = vmatpush1.xpose.msra.mxu0 %v353
        %496 = vmatprep.subr.mxu0 %v356
        %497 = vmatpush1.xpose.msra.mxu0 %v355
        %498 = vmatprep.subr.mxu0 %v358
        %499 = vmatpush1.xpose.msra.mxu0 %v357
        %500 = vmatprep.subr.mxu0 %v360
        %501 = vmatpush1.xpose.msra.mxu0 %v359
        %502 = vmatprep.subr.mxu0 %v362
        %503 = vmatpush1.xpose.msra.mxu0 %v361
        %504 = vmatprep.subr.mxu0 %v364
        %505 = vmatpush1.xpose.msra.mxu0 %v363
        %506 = vmatprep.subr.mxu0 %v366
        %507 = vmatpush1.xpose.msra.mxu0 %v365
        %508 = vmatprep.subr.mxu0 %v368
        %509 = vmatpush1.xpose.msra.mxu0 %v367
        %510 = vmatprep.subr.mxu0 %v370
        %511 = vmatpush1.xpose.msra.mxu0 %v369
        %512 = vmatprep.subr.mxu0 %v372
        %513 = vmatpush1.xpose.msra.mxu0 %v371
        %514 = vmatprep.subr.mxu0 %v374
        %515 = vmatpush1.xpose.msra.mxu0 %v373
        %516 = vmatprep.subr.mxu0 %v376
        %517 = vmatpush1.xpose.msra.mxu0 %v375
        %518 = vmatprep.subr.mxu0 %v378
        %519 = vmatpush1.xpose.msra.mxu0 %v377
        %520 = vmatprep.subr.mxu0 %v380
        %521 = vmatpush1.xpose.msra.mxu0 %v379
        %522 = vmatprep.subr.mxu0 %v382
        %523 = vmatpush1.xpose.msra.mxu0 %v381
        %524 = vmatprep.subr.mxu0 %v384
        %525 = vmatpush1.xpose.msra.mxu0 %v383
        %526 = vmatprep.subr.mxu0 %v386
        %527 = vmatpush1.xpose.msra.mxu0 %v385
        %528 = vmatprep.subr.mxu0 %v388
        %529 = vmatpush1.xpose.msra.mxu0 %v387
        %530 = vmatprep.subr.mxu0 %v390
        %531 = vmatpush1.xpose.msra.mxu0 %v389
        %532 = vmatprep.subr.mxu0 %v392
        %533 = vmatpush1.xpose.msra.mxu0 %v391
        %534 = vmatprep.subr.mxu0 %v394
        %535 = vmatpush1.xpose.msra.mxu0 %v393
        %536 = vmatprep.subr.mxu0 %v396
        %537 = vmatpush1.xpose.msra.mxu0 %v395
        %538 = vmatprep.subr.mxu0 %v398
        %539 = vmatpush1.xpose.msra.mxu0 %v397
        %540 = vmatprep.subr.mxu0 %v400
        %541 = vmatpush1.xpose.msra.mxu0 %v399
        %542 = vmatprep.mubr.f32.mxu0 %v270
        %543 = vmatmul.mubr.f32.gmra.mrb[0].mxu0 %v269
        %v544 = vpop.f32.mrb[0].mxu0
        %v545 = vadd.f32 0.0, %v544
        %v546 = vpop.f32.mrb[0].mxu0
        %v547 = vadd.f32 0.0, %v546
        %548 = vmatprep.mubr.f32.mxu0 %v272
        %549 = vmatmul.mubr.f32.gmra.mrb[0].mxu0 %v271
        %v550 = vpop.f32.mrb[0].mxu0
        %v551 = vadd.f32 0.0, %v550
        %v552 = vpop.f32.mrb[0].mxu0
        %v553 = vadd.f32 0.0, %v552
        %554 = vdwg.mxu0
        %v555 = vxor.u32 %v468, 2147483648
        %v556 = vxor.u32 %v470, 2147483648
        %v557 = vxor.u32 %v474, 2147483648
        %v558 = vxor.u32 %v476, 2147483648
        %v559 = vmul.f32 %v555, 1.442695
        %v560 = vpow.pop %v559
        %v561 = vmul.f32 %v556, 1.442695
        %v562 = vpow.pop %v561
        %v563 = vmul.f32 %v557, 1.442695
        %v564 = vpow.pop %v563
        %v565 = vmul.f32 %v558, 1.442695
        %v566 = vpow.pop %v565
        %v567 = vadd.f32 %v560, 1.0
        %v568 = vadd.f32 %v562, 1.0
        %v569 = vadd.f32 %v564, 1.0
        %v570 = vadd.f32 %v566, 1.0
        %v571 = vrcp.pop %v567
        %v572 = vmul.f32 1.0, %v571
        %v573 = vrcp.pop %v568
        %v574 = vmul.f32 1.0, %v573
        %v575 = vrcp.pop %v569
        %v576 = vmul.f32 1.0, %v575
        %v577 = vrcp.pop %v570
        %v578 = vmul.f32 1.0, %v577
        %v579 = vmul.f32 %v468, %v572
        %v580 = vmul.f32 %v470, %v574
        %v581 = vmul.f32 %v474, %v576
        %v582 = vmul.f32 %v476, %v578
        %v583 = vmul.f32 %v579, %v545
        %v584 = vmul.f32 %v580, %v547
        %v585 = vmul.f32 %v581, %v551
        %v586 = vmul.f32 %v582, %v553
        %v587 = vld [vmem:[#allocation2] sm:$0xff]
        %v588 = vld [vmem:[#allocation2 + $0x8] sm:$0xff]
        %v589 = vld [vmem:[#allocation2 + $0x10] sm:$0xff]
        %v590 = vld [vmem:[#allocation2 + $0x18] sm:$0xff]
        %v591 = vld [vmem:[%s234] sm:$0xff]
        %v592 = vld [vmem:[%s234 + $0x8] sm:$0xff]
        %v593 = vld [vmem:[%s234 + $0x10] sm:$0xff]
        %v594 = vld [vmem:[%s234 + $0x18] sm:$0xff]
        %v595 = vld [vmem:[%s234 + $0x20] sm:$0xff]
        %v596 = vld [vmem:[%s234 + $0x28] sm:$0xff]
        %v597 = vld [vmem:[%s234 + $0x30] sm:$0xff]
        %v598 = vld [vmem:[%s234 + $0x38] sm:$0xff]
        %v599 = vld [vmem:[%s234 + $0x40] sm:$0xff]
        %v600 = vld [vmem:[%s234 + $0x48] sm:$0xff]
        %v601 = vld [vmem:[%s234 + $0x50] sm:$0xff]
        %v602 = vld [vmem:[%s234 + $0x58] sm:$0xff]
        %v603 = vld [vmem:[%s234 + $0x60] sm:$0xff]
        %v604 = vld [vmem:[%s234 + $0x68] sm:$0xff]
        %v605 = vld [vmem:[%s234 + $0x70] sm:$0xff]
        %v606 = vld [vmem:[%s234 + $0x78] sm:$0xff]
        %v607 = vld [vmem:[%s234 + $0x80] sm:$0xff]
        %v608 = vld [vmem:[%s234 + $0x88] sm:$0xff]
        %v609 = vld [vmem:[%s234 + $0x90] sm:$0xff]
        %v610 = vld [vmem:[%s234 + $0x98] sm:$0xff]
        %v611 = vld [vmem:[%s234 + $0xa0] sm:$0xff]
        %v612 = vld [vmem:[%s234 + $0xa8] sm:$0xff]
        %v613 = vld [vmem:[%s234 + $0xb0] sm:$0xff]
        %v614 = vld [vmem:[%s234 + $0xb8] sm:$0xff]
        %v615 = vld [vmem:[%s234 + $0xc0] sm:$0xff]
        %v616 = vld [vmem:[%s234 + $0xc8] sm:$0xff]
        %v617 = vld [vmem:[%s234 + $0xd0] sm:$0xff]
        %v618 = vld [vmem:[%s234 + $0xd8] sm:$0xff]
        %v619 = vld [vmem:[%s234 + $0xe0] sm:$0xff]
        %v620 = vld [vmem:[%s234 + $0xe8] sm:$0xff]
        %v621 = vld [vmem:[%s234 + $0xf0] sm:$0xff]
        %v622 = vld [vmem:[%s234 + $0xf8] sm:$0xff]
        %v623 = vld [vmem:[%s234 + $0x100] sm:$0xff]
        %v624 = vld [vmem:[%s234 + $0x108] sm:$0xff]
        %v625 = vld [vmem:[%s234 + $0x110] sm:$0xff]
        %v626 = vld [vmem:[%s234 + $0x118] sm:$0xff]
        %v627 = vld [vmem:[%s234 + $0x120] sm:$0xff]
        %v628 = vld [vmem:[%s234 + $0x128] sm:$0xff]
        %v629 = vld [vmem:[%s234 + $0x130] sm:$0xff]
        %v630 = vld [vmem:[%s234 + $0x138] sm:$0xff]
        %v631 = vld [vmem:[%s234 + $0x140] sm:$0xff]
        %v632 = vld [vmem:[%s234 + $0x148] sm:$0xff]
        %v633 = vld [vmem:[%s234 + $0x150] sm:$0xff]
        %v634 = vld [vmem:[%s234 + $0x158] sm:$0xff]
        %v635 = vld [vmem:[%s234 + $0x160] sm:$0xff]
        %v636 = vld [vmem:[%s234 + $0x168] sm:$0xff]
        %v637 = vld [vmem:[%s234 + $0x170] sm:$0xff]
        %v638 = vld [vmem:[%s234 + $0x178] sm:$0xff]
        %v639 = vld [vmem:[%s234 + $0x180] sm:$0xff]
        %v640 = vld [vmem:[%s234 + $0x188] sm:$0xff]
        %v641 = vld [vmem:[%s234 + $0x190] sm:$0xff]
        %v642 = vld [vmem:[%s234 + $0x198] sm:$0xff]
        %v643 = vld [vmem:[%s234 + $0x1a0] sm:$0xff]
        %v644 = vld [vmem:[%s234 + $0x1a8] sm:$0xff]
        %v645 = vld [vmem:[%s234 + $0x1b0] sm:$0xff]
        %v646 = vld [vmem:[%s234 + $0x1b8] sm:$0xff]
        %v647 = vld [vmem:[%s234 + $0x1c0] sm:$0xff]
        %v648 = vld [vmem:[%s234 + $0x1c8] sm:$0xff]
        %v649 = vld [vmem:[%s234 + $0x1d0] sm:$0xff]
        %v650 = vld [vmem:[%s234 + $0x1d8] sm:$0xff]
        %v651 = vld [vmem:[%s234 + $0x1e0] sm:$0xff]
        %v652 = vld [vmem:[%s234 + $0x1e8] sm:$0xff]
        %v653 = vld [vmem:[%s234 + $0x1f0] sm:$0xff]
        %v654 = vld [vmem:[%s234 + $0x1f8] sm:$0xff]
        %655 = vmatprep.subr.mxu0 %v592
        %656 = vmatpush1.msra.mxu0 %v591
        %657 = vmatprep.subr.mxu0 %v594
        %658 = vmatpush1.msra.mxu0 %v593
        %659 = vmatprep.subr.mxu0 %v596
        %660 = vmatpush1.msra.mxu0 %v595
        %661 = vmatprep.subr.mxu0 %v598
        %662 = vmatpush1.msra.mxu0 %v597
        %663 = vmatprep.subr.mxu0 %v600
        %664 = vmatpush1.msra.mxu0 %v599
        %665 = vmatprep.subr.mxu0 %v602
        %666 = vmatpush1.msra.mxu0 %v601
        %667 = vmatprep.subr.mxu0 %v604
        %668 = vmatpush1.msra.mxu0 %v603
        %669 = vmatprep.subr.mxu0 %v606
        %670 = vmatpush1.msra.mxu0 %v605
        %671 = vmatprep.subr.mxu0 %v608
        %672 = vmatpush1.msra.mxu0 %v607
        %673 = vmatprep.subr.mxu0 %v610
        %674 = vmatpush1.msra.mxu0 %v609
        %675 = vmatprep.subr.mxu0 %v612
        %676 = vmatpush1.msra.mxu0 %v611
        %677 = vmatprep.subr.mxu0 %v614
        %678 = vmatpush1.msra.mxu0 %v613
        %679 = vmatprep.subr.mxu0 %v616
        %680 = vmatpush1.msra.mxu0 %v615
        %681 = vmatprep.subr.mxu0 %v618
        %682 = vmatpush1.msra.mxu0 %v617
        %683 = vmatprep.subr.mxu0 %v620
        %684 = vmatpush1.msra.mxu0 %v619
        %685 = vmatprep.subr.mxu0 %v622
        %686 = vmatpush1.msra.mxu0 %v621
        %687 = vmatprep.subr.mxu0 %v624
        %688 = vmatpush1.msra.mxu0 %v623
        %689 = vmatprep.subr.mxu0 %v626
        %690 = vmatpush1.msra.mxu0 %v625
        %691 = vmatprep.subr.mxu0 %v628
        %692 = vmatpush1.msra.mxu0 %v627
        %693 = vmatprep.subr.mxu0 %v630
        %694 = vmatpush1.msra.mxu0 %v629
        %695 = vmatprep.subr.mxu0 %v632
        %696 = vmatpush1.msra.mxu0 %v631
        %697 = vmatprep.subr.mxu0 %v634
        %698 = vmatpush1.msra.mxu0 %v633
        %699 = vmatprep.subr.mxu0 %v636
        %700 = vmatpush1.msra.mxu0 %v635
        %701 = vmatprep.subr.mxu0 %v638
        %702 = vmatpush1.msra.mxu0 %v637
        %703 = vmatprep.subr.mxu0 %v640
        %704 = vmatpush1.msra.mxu0 %v639
        %705 = vmatprep.subr.mxu0 %v642
        %706 = vmatpush1.msra.mxu0 %v641
        %707 = vmatprep.subr.mxu0 %v644
        %708 = vmatpush1.msra.mxu0 %v643
        %709 = vmatprep.subr.mxu0 %v646
        %710 = vmatpush1.msra.mxu0 %v645
        %711 = vmatprep.subr.mxu0 %v648
        %712 = vmatpush1.msra.mxu0 %v647
        %713 = vmatprep.subr.mxu0 %v650
        %714 = vmatpush1.msra.mxu0 %v649
        %715 = vmatprep.subr.mxu0 %v652
        %716 = vmatpush1.msra.mxu0 %v651
        %717 = vmatprep.subr.mxu0 %v654
        %718 = vmatpush1.msra.mxu0 %v653
        %719 = vmatprep.mubr.f32.mxu0 %v584
        %720 = vmatmul.mubr.f32.gmra.mrb[0].mxu0 %v583
        %v721 = vpop.f32.mrb[0].mxu0
        %v722 = vadd.f32 0.0, %v721
        %v723 = vpop.f32.mrb[0].mxu0
        %v724 = vadd.f32 0.0, %v723
        %725 = vmatprep.mubr.f32.mxu0 %v586
        %726 = vmatmul.mubr.f32.gmra.mrb[0].mxu0 %v585
        %v727 = vpop.f32.mrb[0].mxu0
        %v728 = vadd.f32 0.0, %v727
        %v729 = vpop.f32.mrb[0].mxu0
        %v730 = vadd.f32 0.0, %v729
        %731 = vdwg.mxu0
        %v732 = vadd.f32 %v587, %v722
        %v733 = vadd.f32 %v588, %v724
        %v734 = vadd.f32 %v589, %v728
        %v735 = vadd.f32 %v590, %v730
        %736 = vst [vmem:[#allocation2] sm:$0xff] %v732
        %737 = vst [vmem:[#allocation2 + $0x8] sm:$0xff] %v733
        %738 = vst [vmem:[#allocation2 + $0x10] sm:$0xff] %v734
        %739 = vst [vmem:[#allocation2 + $0x18] sm:$0xff] %v735
        %p740 = scmp.eq.s32.totalorder %s24, 1
        // Predicated region
        $region49: #{deepseek_v2_mlp.1} parent=31 // pred_check
          %p741 = pneg %p740
        $region50: #{deepseek_v2_mlp.1} parent=31 // pred_check_branch
          %743 = sbr.rel (%p741) target = $region52
        $region51: #{deepseek_v2_mlp.1} parent=31 // pred_region
          %v744 = vld [vmem:[#allocation2] sm:$0xff]
          %v745 = vld [vmem:[#allocation2 + $0x8] sm:$0xff]
          %v746 = vld [vmem:[#allocation2 + $0x10] sm:$0xff]
          %v747 = vld [vmem:[#allocation2 + $0x18] sm:$0xff]
          %748 = vst [vmem:[#allocation9] sm:$0xff] %v744
          %749 = vst [vmem:[#allocation9 + $0x8] sm:$0xff] %v745
          %750 = vst [vmem:[#allocation9 + $0x10] sm:$0xff] %v746
          %751 = vst [vmem:[#allocation9 + $0x18] sm:$0xff] %v747
        $region52: #{deepseek_v2_mlp.1} parent=31 // pred_fallthru
          _
        // Predicated region
        $region53: #{deepseek_v2_mlp.1} parent=31 // pred_check
          %p752 = pneg %p127
        $region54: #{deepseek_v2_mlp.1} parent=31 // pred_check_branch
          %754 = sbr.rel (%p752) target = $region56
        $region55: #{deepseek_v2_mlp.1} parent=31 // pred_region
          %s755 = smul.u32 2, %s23
          %s757 = ssub.s32 512, 512
          %758 = vsyncadd [#allocation5], %s757
          %s759 = smul.addr %s755, 2
          %s760 = smul.addr %s759, 128
          %s761 = scalar_lea.hbm %s3, %s760
          %s762 = sshll.u32 [#allocation9], 4
          %s763 = int_to_ptr.vmem [resolvable:$true] %s762
          %768 = dma.vmem_to_hbm [thread:$0]  %s763, 512, %s761, [#allocation5], 256, 256, 16
        $region56: #{deepseek_v2_mlp.1} parent=31 // pred_fallthru
          _
        // Predicated region
        $region57: #{deepseek_v2_mlp.1} parent=31 // pred_check
          %p769 = pneg %p127
        $region58: #{deepseek_v2_mlp.1} parent=31 // pred_check_branch
          %771 = sbr.rel (%p769) target = $region60
        $region59: #{deepseek_v2_mlp.1} parent=31 // pred_region
          %772 = dma.done [#allocation5], 512
        $region60: #{deepseek_v2_mlp.1} parent=31 // pred_fallthru
          _
      $region32: #{deepseek_v2_mlp.1} parent=5 // pred_fallthru
        _
      %p773 = scmp.le.s32.totalorder 2, %s14
      // Predicated region
      $region61: #{deepseek_v2_mlp.1} parent=5 // pred_check
        %p774 = pneg %p773
      $region62: #{deepseek_v2_mlp.1} parent=5 // pred_check_branch
        %776 = sbr.rel (%p774) target = $region64
      $region63: #{deepseek_v2_mlp.1} parent=5 // pred_region
        %s777 = ssub.s32 %s14, 2
      $region64: #{deepseek_v2_mlp.1} parent=5 // pred_fallthru
        _
    $region6: #{deepseek_v2_mlp.1} parent=1 // loop_footer
      %s18 = sadd.s32 1, %s14
    $region7: #{deepseek_v2_mlp.1} parent=1 // loop_footer_branch
      %13 = sbr.rel target = $region3
    $region8: #{deepseek_v2_mlp.1} parent=1 // loop_exit
      _
    %778 = vsyncpa [#allocation4], 1
    %s779 = scalar_lea.sflag [#allocation4], 1
    %780 = vsyncpa %s779, 1
    %781 = vsyncpa [#allocation7], 1
    %s782 = scalar_lea.sflag [#allocation7], 1
    %783 = vsyncpa %s782, 1
    %784 = vsyncpa [#allocation5], 1
    %s785 = scalar_lea.sflag [#allocation5], 1
    %786 = vsyncpa %s785, 1

</llo_original>
